<compile_context>
chip_gen: v7x
topology: tpu7x:2x2x1
jax: 0.10.0
libtpu: 0.0.40
codegen_flags: <defaults>
</compile_context>

<pallas_src>
import functools

import jax
import jax.numpy as jnp
from jax import lax
from jax.experimental import pallas as pl
from jax.experimental.pallas import tpu as pltpu


_DEFAULT_BLOCK_BYTES = 8 * 1024 * 1024   # ~8 MiB/input block.
_SMALL_BLOCK_BYTES = 2 * 1024 * 1024     # below this, use 3-deep input buffering.


def _mac_kernel(x_ref, o_ref, *, masked_tail, hw, t_hw, neg_value):
    """Blockwise global max over the spatial (lane) axis.

    x_ref: (n_tile, c_tile, t_hw) input tile in VMEM.
    o_ref: (n_tile, c_tile, 1) max accumulator, resident across the spatial axis.
    """
    k = pl.program_id(2)

    @pl.when(k == 0)
    def _():
        o_ref[...] = jnp.full(o_ref.shape, neg_value, o_ref.dtype)

    if not masked_tail:
        o_ref[...] = jnp.maximum(
            o_ref[...], jnp.max(x_ref[...], axis=-1, keepdims=True))
    else:
        last = pl.num_programs(2) - 1

        @pl.when(k != last)
        def _():
            o_ref[...] = jnp.maximum(
                o_ref[...], jnp.max(x_ref[...], axis=-1, keepdims=True))

        @pl.when(k == last)
        def _():
            # Mask the ragged spatial tail so padding never feeds a real max.
            x = x_ref[...]
            lane = lax.broadcasted_iota(jnp.int32, x.shape, dimension=2)
            x = jnp.where(lane + k * t_hw < hw, x,
                          jnp.asarray(neg_value, x.dtype))
            o_ref[...] = jnp.maximum(
                o_ref[...], jnp.max(x, axis=-1, keepdims=True))


def _aligned_divisor(value, cap, align):
    """Largest divisor of `value` that is a multiple of `align` and <= cap, or None."""
    if cap < align:
        return None
    d = (cap // align) * align
    while d >= align:
        if value % d == 0:
            return d
        d -= align
    return None


def _choose_tiles(n, c, hw, itemsize, budget):
    """Pick (n_tile, c_tile, t_hw) block dims for x viewed as (N, C, HW)."""
    pack = max(8, 32 // max(1, itemsize))   # sublane packing: 8 f32 / 16 bf16 / 32 i8
    row_bytes = hw * itemsize

    # --- Channel (sublane) tile: prefer keeping the full HW row on lanes, so
    # each DMA segment is one long contiguous row; shrink C first. ---
    c_tile = c
    t_hw = hw
    if c * row_bytes > budget:
        cap = max(pack, budget // max(1, row_bytes))
        d = _aligned_divisor(c, min(c - 1, cap), pack)
        if d is not None:
            c_tile = d
        # else: no pack-aligned channel divisor fits -> keep full C and fall
        # back to tiling HW below so the block still respects the budget.

    # --- Spatial (lane) tile: only when the chosen (c_tile x HW) slab still
    # exceeds the budget. Lane-aligned; ragged tail masked in-kernel. ---
    if c_tile * row_bytes > budget and hw > 128:
        lane_budget = max(128, budget // max(1, c_tile * itemsize))
        t_hw = min(hw, max(128, (lane_budget // 128) * 128))

    # --- Batch grouping: when a whole feature map is far below budget the
    # kernel is per-step-overhead bound; pack batch rows per block, but keep
    # >= 2 parallel batch blocks so both v7x TensorCores stay busy. ---
    n_tile = 1
    if t_hw == hw and c_tile == c and n >= 4:
        map_bytes = max(1, c * hw * itemsize)
        cap = min(n // 2, budget // map_bytes)
        for cand in range(cap, 1, -1):
            if n % cand == 0:
                n_tile = cand
                break

    # --- Megacore guarantee: if there is only one parallel block (e.g. N == 1
    # with full C), split the channel axis so both TensorCores get work. ---
    if (n // n_tile) * (c // c_tile) < 2:
        d = _aligned_divisor(c, c // 2, pack)
        if d is not None:
            c_tile = d

    return n_tile, c_tile, t_hw


def mac(x, *, block_budget_bytes=_DEFAULT_BLOCK_BYTES):
    """Global spatial max pooling (MAC). x: (N, C, H, W) -> (N, C, 1, 1)."""
    n, c, h, w = x.shape
    hw = h * w
    # Contiguous reshape only (no transpose): channels on sublanes, spatial on lanes.
    x3 = x.reshape(n, c, hw)

    dt = jnp.dtype(x.dtype)
    itemsize = dt.itemsize
    n_tile, c_tile, t_hw = _choose_tiles(n, c, hw, itemsize, block_budget_bytes)

    if jnp.issubdtype(dt, jnp.floating):
        neg_value = -float("inf")
    else:
        neg_value = int(jnp.iinfo(dt).min)

    masked_tail = (hw % t_hw) != 0
    kernel = functools.partial(_mac_kernel, masked_tail=masked_tail, hw=hw,
                               t_hw=t_hw, neg_value=neg_value)

    grid = (n // n_tile, c // c_tile, pl.cdiv(hw, t_hw))
    total_steps = grid[0] * grid[1] * grid[2]
    block_bytes = n_tile * c_tile * t_hw * itemsize

    # Deeper input buffering only pays off for small blocks with many steps;
    # for big blocks the extra buffer just eats VMEM (a real cost on v7x).
    in_kwargs = {}
    if block_bytes <= _SMALL_BLOCK_BYTES and total_steps >= 4:
        in_kwargs["pipeline_mode"] = pl.Buffered(3)

    in_spec = pl.BlockSpec((n_tile, c_tile, t_hw), lambda i, j, k: (i, j, k),
                           **in_kwargs)
    out_spec = pl.BlockSpec((n_tile, c_tile, 1), lambda i, j, k: (i, j, 0))

    # Pure streaming kernel: declare it to XLA's scheduler.
    cost = pl.CostEstimate(
        flops=n * c * hw,
        transcendentals=0,
        bytes_accessed=n * c * hw * itemsize + n * c * itemsize,
    )

    # Enough for 2-3 buffered input blocks + tiny output; safe on every chip
    # (<= v7x's 64 MiB physical VMEM).
    vmem_limit = min(96 * 1024 * 1024, max(32 * 1024 * 1024, 3 * block_bytes))

    out = pl.pallas_call(
        kernel,
        out_shape=jax.ShapeDtypeStruct((n, c, 1), x.dtype),
        grid_spec=pltpu.PrefetchScalarGridSpec(
            num_scalar_prefetch=0,
            grid=grid,
            in_specs=[in_spec],
            out_specs=out_spec,
        ),
        compiler_params=pltpu.CompilerParams(
            dimension_semantics=("parallel", "parallel", "arbitrary"),
            vmem_limit_bytes=int(vmem_limit),
        ),
        cost_estimate=cost,
    )(x3)

    return out.reshape(n, c, 1, 1)


if __name__ == "__main__":
    key = jax.random.PRNGKey(0)

    # Primary check: small, aligned shape.
    x = jax.random.normal(key, (2, 4, 16, 16), dtype=jnp.float32)
    y = mac(x)
    jax.block_until_ready(y)
    y_ref = jnp.max(x, axis=(2, 3), keepdims=True)
    assert y.shape == (2, 4, 1, 1), y.shape
    assert jnp.allclose(y, y_ref), "mismatch vs reference"

    # Odd, non-aligned spatial dims (full-extent block path).
    x2 = jax.random.normal(jax.random.PRNGKey(1), (2, 8, 7, 9), dtype=jnp.float32)
    y2 = mac(x2)
    jax.block_until_ready(y2)
    assert jnp.allclose(y2, jnp.max(x2, axis=(2, 3), keepdims=True)), "odd shape"

    # Batch-grouping path (several maps per block, >= 2 parallel blocks kept).
    x3 = jax.random.normal(jax.random.PRNGKey(2), (8, 4, 16, 16), dtype=jnp.float32)
    y3 = mac(x3)
    jax.block_until_ready(y3)
    assert jnp.allclose(y3, jnp.max(x3, axis=(2, 3), keepdims=True)), "grouped batch"

    # Spatial-tiled path with resident accumulator, masked ragged tail, N==1
    # channel split, and Buffered(3): force it at a small shape via a tiny budget.
    x4 = jax.random.normal(jax.random.PRNGKey(3), (1, 16, 32, 33), dtype=jnp.float32)
    y4 = mac(x4, block_budget_bytes=16 * 1024)
    jax.block_until_ready(y4)
    assert jnp.allclose(y4, jnp.max(x4, axis=(2, 3), keepdims=True)), "tiled spatial"

    print("KERNEL_OK")
</pallas_src>

<mosaic_0001>
module attributes {stable_mosaic.version = 11 : i64} {
  func.func @_mac_kernel(%arg0: i32, %arg1: i32, %arg2: i32, %arg3: memref<1x4x256xf32, #tpu.memory_space<vmem>>, %arg4: memref<1x4x1xf32, #tpu.memory_space<vmem>>) attributes {dimension_semantics = [#tpu.dimension_semantics<parallel>, #tpu.dimension_semantics<parallel>, #tpu.dimension_semantics<arbitrary>], iteration_bounds = array<i64: 2, 1, 1>, scalar_prefetch = 0 : i64, scratch_operands = 0 : i64, tpu.core_type = #tpu.core_type<tc>, window_params = [{transform_indices = @transform_0, window_bounds = array<i64: 1, 4, 256>}, {transform_indices = @transform_1, window_bounds = array<i64: 1, 4, 1>}]} {
    %c0_i32 = arith.constant 0 : i32
    %0 = arith.cmpi eq, %arg2, %c0_i32 : i32
    %1 = arith.extui %0 : i1 to i32
    %c0_i32_0 = arith.constant 0 : i32
    %2 = arith.cmpi ne, %1, %c0_i32_0 : i32
    scf.if %2 {
      %cst_9 = arith.constant 0xFF800000 : f32
      %9 = vector.broadcast %cst_9 : f32 to vector<1x4x1xf32>
      %c0_10 = arith.constant 0 : index
      %c0_11 = arith.constant 0 : index
      %c0_12 = arith.constant 0 : index
      %10 = vector.load %arg4[%c0_10, %c0_11, %c0_12] : memref<1x4x1xf32, #tpu.memory_space<vmem>>, vector<1x4x1xf32>
      tpu.vector_store %arg4[%c0_10, %c0_11, %c0_12], %9 {strides = array<i32>} : memref<1x4x1xf32, #tpu.memory_space<vmem>>, vector<1x4x1xf32>,
    } else {
    }
    %c0 = arith.constant 0 : index
    %c0_1 = arith.constant 0 : index
    %c0_2 = arith.constant 0 : index
    %3 = vector.load %arg4[%c0, %c0_1, %c0_2] : memref<1x4x1xf32, #tpu.memory_space<vmem>>, vector<1x4x1xf32>
    %c0_3 = arith.constant 0 : index
    %c0_4 = arith.constant 0 : index
    %c0_5 = arith.constant 0 : index
    %4 = vector.load %arg3[%c0_3, %c0_4, %c0_5] : memref<1x4x256xf32, #tpu.memory_space<vmem>>, vector<1x4x256xf32>
    %cst = arith.constant dense<0xFF800000> : vector<1x4xf32>
    %5 = vector.multi_reduction <maximumf>, %4, %cst [2] : vector<1x4x256xf32> to vector<1x4xf32>
    %6 = vector.shape_cast %5 : vector<1x4xf32> to vector<1x4x1xf32>
    %7 = arith.maximumf %3, %6 : vector<1x4x1xf32>
    %c0_6 = arith.constant 0 : index
    %c0_7 = arith.constant 0 : index
    %c0_8 = arith.constant 0 : index
    %8 = vector.load %arg4[%c0_6, %c0_7, %c0_8] : memref<1x4x1xf32, #tpu.memory_space<vmem>>, vector<1x4x1xf32>
    tpu.vector_store %arg4[%c0_6, %c0_7, %c0_8], %7 {strides = array<i32>} : memref<1x4x1xf32, #tpu.memory_space<vmem>>, vector<1x4x1xf32>,
    return
  }
  func.func @transform_0(%arg0: i32, %arg1: i32, %arg2: i32) -> (i32, i32, i32) {
    %c0_i32 = arith.constant 0 : i32
    return %arg0, %arg1, %arg2 : i32, i32, i32
  }
  func.func @transform_1(%arg0: i32, %arg1: i32, %arg2: i32) -> (i32, i32, i32) {
    %c0_i32 = arith.constant 0 : i32
    %c0_i32_0 = arith.constant 0 : i32
    return %arg0, %arg1, %c0_i32 : i32, i32, i32
  }
}

</mosaic_0001>

<llo_original>
// kernel: tpu_custom_call.1
$region0: #{tpu_custom_call.1}
  #allocation0 [shape = 'u32[]', space=smem, size = 0x4, offset = 0x4, fixed_abs, tag = 'smem constant byte address 0x4 - core index']
  #allocation1 [shape = 'u32[144,128]{1,0:T(1,128)}', space=vmem, size = 0x12000, scoped, tag = 'internal scratch']
  %s0 = inlined_call_operand.hbm [shape: f32[2,4,256], index: 0, kind: input, shape index: {}]
  %s1 = inlined_call_operand.vmem [shape: f32[2,4,1], index: 1, kind: output, shape index: {}]
  %s2 = sld [smem:[#allocation0]]
  $region45: #{tpu_custom_call.1} parent=0
    _
  %s4 = ssub.s32 1, %s2
  %s5 = scalar_select 0, %s4, %s2
  $region1: #{tpu_custom_call.1} parent=0
    #allocation2 [shape = 'u8[8192]{0}', space=vmem, size = 0x2000, scoped, tag = 'input window, operand 0']
    #allocation3 [shape = 's32[2]{0}', space=sflag, size = 0x8, scoped, tag = 'scoped memory for tpu_custom_call.1']
    %6 = vsyncpa [#allocation3], 0
    %s7 = scalar_lea.sflag [#allocation3], 1
    %8 = vsyncpa %s7, 0
    loop: start=0, step=1, limit=4
    $region2: #{tpu_custom_call.1} parent=1 // loop_pre_header
      _
    $region3: #{tpu_custom_call.1} parent=1 // loop_header
      %s10 = sphi 0, %s14
      %p11 = scmp.ge.s32.totalorder %s10, 4
      %s17 = sphi 0, %s36
      %s18 = sphi 0, %s32
      %s19 = sphi 0, %s28
      %s20 = sphi 0, %s17
      %s21 = sphi 0, %s18
      %s22 = sphi 0, %s19
      %s23 = sphi 0, %s20
      %s24 = sphi 0, %s21
      %s25 = sphi 0, %s22
      %s43 = sphi 0, %s45
      %s46 = sphi 0, %s43
      %s47 = sphi 0, %s46
      %s63 = sphi 0, %s47
      %s71 = sphi 0, %s73
      %s74 = sphi 0, %s71
      %s75 = sphi 0, %s74
      %s91 = sphi 0, %s75
    $region4: #{tpu_custom_call.1} parent=1 // loop_header_branch
      %13 = sbr.rel (%p11) target = $region8
    $region5: #{tpu_custom_call.1} parent=1 // loop_body
      %s15 = ssub.s32 %s10, 1
      %s16 = ssub.s32 %s10, 2
      %s26 = sadd.s32 1, %s19
      %p27 = scmp.ge.s32.totalorder %s26, 1
      %s28 = scalar_select %p27, 0, %s26
      %s29 = sadd.s32 1, %s18
      %s30 = scalar_select %p27, %s29, %s18
      %p31 = scmp.ge.s32.totalorder %s30, 1
      %s32 = scalar_select %p31, 0, %s30
      %s33 = sadd.s32 1, %s17
      %s34 = scalar_select %p31, %s33, %s17
      %p35 = scmp.ge.s32.totalorder %s34, 2
      %s36 = scalar_select %p35, 0, %s34
      %s37 = ssub.s32 %s17, %s36
      %s38 = ssub.s32 %s18, %s32
      %s39 = sor.u32 %s37, %s38
      %s40 = ssub.s32 %s19, %s28
      %s41 = sor.u32 %s39, %s40
      %p42 = scmp.eq.s32.totalorder %s41, 0
      %s44 = sadd.s32 %s43, 1
      %s45 = scalar_select %p42, %s43, %s44
      %p48 = pneg %p42
      %p49 = scmp.eq.s32.totalorder %s10, 1
      %p50 = por %p48, %p49
      %p51 = scmp.ne.s32.totalorder %s43, %s46
      %p52 = scmp.eq.s32.totalorder %s10, 0
      %p53 = por %p51, %p52
      %p54 = scmp.ne.s32.totalorder %s43, %s46
      %p55 = scmp.eq.s32.totalorder %s15, 1
      %p56 = por %p54, %p55
      %p57 = scmp.ne.s32.totalorder %s46, %s47
      %p58 = scmp.eq.s32.totalorder %s15, 0
      %p59 = por %p57, %p58
      %p60 = scmp.ne.s32.totalorder %s46, %s47
      %p61 = scmp.eq.s32.totalorder %s16, 1
      %p62 = por %p60, %p61
      %p64 = scmp.ne.s32.totalorder %s47, %s63
      %p65 = scmp.eq.s32.totalorder %s16, 0
      %p66 = por %p64, %p65
      %s67 = ssub.s32 %s17, %s36
      %s68 = ssub.s32 %s18, %s32
      %s69 = sor.u32 %s67, %s68
      %p70 = scmp.eq.s32.totalorder %s69, 0
      %s72 = sadd.s32 %s71, 1
      %s73 = scalar_select %p70, %s71, %s72
      %p76 = pneg %p70
      %p77 = scmp.eq.s32.totalorder %s10, 1
      %p78 = por %p76, %p77
      %p79 = scmp.ne.s32.totalorder %s71, %s74
      %p80 = scmp.eq.s32.totalorder %s10, 0
      %p81 = por %p79, %p80
      %p82 = scmp.ne.s32.totalorder %s71, %s74
      %p83 = scmp.eq.s32.totalorder %s15, 1
      %p84 = por %p82, %p83
      %p85 = scmp.ne.s32.totalorder %s74, %s75
      %p86 = scmp.eq.s32.totalorder %s15, 0
      %p87 = por %p85, %p86
      %p88 = scmp.ne.s32.totalorder %s74, %s75
      %p89 = scmp.eq.s32.totalorder %s16, 1
      %p90 = por %p88, %p89
      %p92 = scmp.ne.s32.totalorder %s75, %s91
      %p93 = scmp.eq.s32.totalorder %s16, 0
      %p94 = por %p92, %p93
      %p95 = scmp.le.s32.totalorder 1, %s10
      %p96 = scmp.lt.s32.totalorder %s10, 3
      %p97 = pnand %p95, %p96
      %p98 = pneg %p97
      // Predicated region
      $region9: #{tpu_custom_call.1} parent=5 // pred_check
        _
      $region10: #{tpu_custom_call.1} parent=5 // pred_check_branch
        %100 = sbr.rel (%p97) target = $region12
      $region11: #{tpu_custom_call.1} parent=5 // pred_region
        %s101 = ssub.s32 %s10, 1
      $region12: #{tpu_custom_call.1} parent=5 // pred_fallthru
        _
      %p102 = scmp.lt.s32.totalorder %s10, 2
      // Predicated region
      $region13: #{tpu_custom_call.1} parent=5 // pred_check
        %p103 = pneg %p102
      $region14: #{tpu_custom_call.1} parent=5 // pred_check_branch
        %105 = sbr.rel (%p103) target = $region16
      $region15: #{tpu_custom_call.1} parent=5 // pred_region
        // Predicated region
        $region17: #{tpu_custom_call.1} parent=15 // pred_check
          %p106 = pneg %p53
        $region18: #{tpu_custom_call.1} parent=15 // pred_check_branch
          %108 = sbr.rel (%p106) target = $region20
        $region19: #{tpu_custom_call.1} parent=15 // pred_region
          %s109 = sand.u32 %s43, 1
          %s110 = scalar_lea.sflag [#allocation3], %s109
          %s111 = sand.u32 %s43, 1
          %s112 = smul.addr %s111, 8
          %s113 = scalar_lea.vmem [#allocation2], %s112
          %s114 = smul.u32 2, %s19
          %s116 = ssub.s32 128, 128
          %117 = vsyncadd %s110, %s116
          %s118 = smul.addr %s18, 2
          %s119 = sadd.s32 %s114, %s118
          %s120 = smul.addr %s17, 2
          %s121 = sadd.s32 %s119, %s120
          %s122 = smul.addr %s121, 64
          %s123 = scalar_lea.hbm %s0, %s122
          %s125 = sshll.u32 %s113, 4
          %s126 = int_to_ptr.vmem [resolvable:$true] %s125
          %128 = dma.hbm_to_vmem [thread:$0]  %s123, 128, %s126, %s110
        $region20: #{tpu_custom_call.1} parent=15 // pred_fallthru
          _
      $region16: #{tpu_custom_call.1} parent=5 // pred_fallthru
        _
      %p129 = scmp.le.s32.totalorder 1, %s10
      %p130 = scmp.lt.s32.totalorder %s10, 3
      %p131 = pnand %p129, %p130
      %p132 = pneg %p131
      // Predicated region
      $region21: #{tpu_custom_call.1} parent=5 // pred_check
        _
      $region22: #{tpu_custom_call.1} parent=5 // pred_check_branch
        %134 = sbr.rel (%p131) target = $region24
      $region23: #{tpu_custom_call.1} parent=5 // pred_region
        %s135 = ssub.s32 %s10, 1
        %s136 = sand.u32 %s46, 1
        %s137 = scalar_lea.sflag [#allocation3], %s136
        %s138 = sand.u32 %s46, 1
        %s139 = smul.addr %s138, 8
        %s140 = scalar_lea.vmem [#allocation2], %s139
        // Predicated region
        $region25: #{tpu_custom_call.1} parent=23 // pred_check
          %p141 = pneg %p59
        $region26: #{tpu_custom_call.1} parent=23 // pred_check_branch
          %143 = sbr.rel (%p141) target = $region28
        $region27: #{tpu_custom_call.1} parent=23 // pred_region
          %144 = dma.done %s137, 128
        $region28: #{tpu_custom_call.1} parent=23 // pred_fallthru
          _
        %s145 = sand.u32 %s46, 1
        %s146 = scalar_lea.sflag [#allocation3], %s145
        %s147 = sand.u32 %s46, 1
        %s148 = smul.addr %s147, 8
        %s149 = scalar_lea.vmem [#allocation2], %s148
        %p150 = pneg %p59
        %p151 = pneg %p56
        %p152 = pneg %p87
        %p153 = pneg %p84
        %p154 = scmp.lt.s32.totalorder %s20, 1
        %s155 = scalar_select %p154, %s20, 1
        %p156 = scmp.lt.s32.totalorder %s21, 0
        %s157 = scalar_select %p156, %s21, 0
        %s158 = sadd.s32 %s157, %s155
        %s159 = smul.addr %s158, 4
        %s160 = scalar_lea.vmem %s1, %s159
        %s161 = smul.u32 2, %s22
        %p162 = scmp.lt.s32.totalorder %s20, 1
        %s163 = scalar_select %p162, %s20, 1
        %p164 = scmp.lt.s32.totalorder %s21, 0
        %s165 = scalar_select %p164, %s21, 0
        %s166 = sadd.s32 %s165, %s163
        %s167 = smul.addr %s166, 4
        %s168 = scalar_lea.vmem %s1, %s167
        %p169 = scmp.eq.s32.totalorder %s22, 0
        // Predicated region
        $region29: #{tpu_custom_call.1} parent=23 // pred_check
          %p170 = pneg %p169
        $region30: #{tpu_custom_call.1} parent=23 // pred_check_branch
          %172 = sbr.rel (%p170) target = $region32
        $region31: #{tpu_custom_call.1} parent=23 // pred_region
          %vm173 = vcmask 3072
          %174 = vst.msk [vmem:[%s168] sm:$0xf] %vm173, -inf
        $region32: #{tpu_custom_call.1} parent=23 // pred_fallthru
          _
        %v175 = vld [vmem:[%s168] sm:$0xf]
        %v176 = vld [vmem:[%s140] sm:$0xff]
        %v178 = vcombine.high %v176, %v176
        %vm180 = vcmask 1043456
        %v181 = vsel %vm180, %v176, -inf
        %v182 = vsel %vm180, %v178, -inf
        %v183 = vmax.f32 %v181, %v182
        %184 = vmax.xlane.f32.xlu0 %v183
        %v185 = vpop.xlane.xlu0 %184
        %v186 = vmax.f32 %v175, %v185
        %vm187 = vcmask 3072
        %188 = vst.msk [vmem:[%s168] sm:$0xf] %vm187, %v186
        %p189 = scmp.lt.s32.totalorder %s20, 1
        %s190 = scalar_select %p189, %s20, 1
        %p191 = scmp.lt.s32.totalorder %s21, 0
        %s192 = scalar_select %p191, %s21, 0
        %s193 = sadd.s32 %s192, %s190
        %s194 = smul.addr %s193, 4
        %s195 = scalar_lea.vmem %s1, %s194
        // Predicated region
        $region33: #{tpu_custom_call.1} parent=23 // pred_check
          %p196 = pneg %p84
        $region34: #{tpu_custom_call.1} parent=23 // pred_check_branch
          %198 = sbr.rel (%p196) target = $region36
        $region35: #{tpu_custom_call.1} parent=23 // pred_region
          _
        $region36: #{tpu_custom_call.1} parent=23 // pred_fallthru
          _
      $region24: #{tpu_custom_call.1} parent=5 // pred_fallthru
        _
      %p199 = scmp.le.s32.totalorder 2, %s10
      // Predicated region
      $region37: #{tpu_custom_call.1} parent=5 // pred_check
        %p200 = pneg %p199
      $region38: #{tpu_custom_call.1} parent=5 // pred_check_branch
        %202 = sbr.rel (%p200) target = $region40
      $region39: #{tpu_custom_call.1} parent=5 // pred_region
        %s203 = ssub.s32 %s10, 2
        // Predicated region
        $region41: #{tpu_custom_call.1} parent=39 // pred_check
          %p204 = pneg %p90
        $region42: #{tpu_custom_call.1} parent=39 // pred_check_branch
          %206 = sbr.rel (%p204) target = $region44
        $region43: #{tpu_custom_call.1} parent=39 // pred_region
          %p207 = scmp.lt.s32.totalorder %s23, 1
          %s208 = scalar_select %p207, %s23, 1
          %p209 = scmp.lt.s32.totalorder %s24, 0
          %s210 = scalar_select %p209, %s24, 0
          %s211 = sadd.s32 %s210, %s208
          %s212 = smul.addr %s211, 4
          %s213 = scalar_lea.vmem %s1, %s212
        $region44: #{tpu_custom_call.1} parent=39 // pred_fallthru
          _
      $region40: #{tpu_custom_call.1} parent=5 // pred_fallthru
        _
    $region6: #{tpu_custom_call.1} parent=1 // loop_footer
      %s14 = sadd.s32 1, %s10
    $region7: #{tpu_custom_call.1} parent=1 // loop_footer_branch
      %9 = sbr.rel target = $region3
    $region8: #{tpu_custom_call.1} parent=1 // loop_exit
      _
    %214 = vsyncpa [#allocation3], 1
    %s215 = scalar_lea.sflag [#allocation3], 1
    %216 = vsyncpa %s215, 1

</llo_original>
